<compile_context>
chip_gen: v7x
topology: tpu7x:2x2x1
jax: 0.10.0
libtpu: 0.0.40
codegen_flags: <defaults>
</compile_context>

<pallas_src>
import jax
import jax.numpy as jnp
from jax.experimental import pallas as pl
from jax.experimental.pallas import tpu as pltpu


_LANE = 128
_MIB = 1 << 20
_TARGET_STEPS = 8           # prefer >= this many grid steps (pipeline steady state)
_MIN_STEP_BYTES = 1 * _MIB  # ...but keep each block above ~1 MiB


# ---------------------------------------------------------------------------
# Hardware-derived budgets
# ---------------------------------------------------------------------------
def _tpu_vmem_bytes():
    """Physical VMEM per TensorCore; conservative 64 MiB fallback (v7x-class)."""
    try:
        info = pltpu.get_tpu_info()
        for attr in ("vmem_capacity_bytes", "vmem_bytes", "vmem_size_bytes"):
            v = getattr(info, attr, None)
            if v:
                return int(v)
    except Exception:
        pass
    return 64 * _MIB


def _budgets():
    """(per-block byte budget, scoped-VMEM ceiling) from the chip's VMEM size."""
    vmem = _tpu_vmem_bytes()
    if vmem >= 100 * _MIB:
        # v5e / v6e: 128 MiB physical VMEM -> big blocks keep more shapes fused.
        return 24 * _MIB, min(100 * _MIB, vmem - 20 * _MIB)
    # v7x: 64 MiB per TensorCore -> leave headroom for compiler scratch.
    return 8 * _MIB, min(52 * _MIB, max(vmem - 12 * _MIB, 16 * _MIB))


def _clamp_vmem(nbytes, ceil):
    return int(min(ceil, max(int(nbytes), 16 * _MIB)))


# ---------------------------------------------------------------------------
# Kernels
# ---------------------------------------------------------------------------
def _make_fused_kernel(inv_hw):
    def kernel(x_ref, w1t_ref, b1_ref, w2t_ref, b2_ref, o_ref):
        # x_ref/o_ref: (Nb, C, HW) in the I/O dtype.  Last two block dims equal
        # the full array dims, so HW need not be a multiple of 128.
        # Weights are lane-oriented row-vector shapes:
        #   w1t: (C, Cr), b1: (1, Cr), w2t: (Cr, C), b2: (1, C)
        # Global average pool in f32 WITHOUT keeping a full f32 copy of the
        # block alive (the cast feeds the reduction only).
        pooled = jnp.sum(x_ref[...].astype(jnp.float32), axis=-1) * inv_hw   # (Nb, C)
        h = jnp.dot(pooled, w1t_ref[...],
                    preferred_element_type=jnp.float32) + b1_ref[...]        # (Nb, Cr)
        h = jnp.maximum(h, 0.0)
        y = jnp.dot(h, w2t_ref[...],
                    preferred_element_type=jnp.float32) + b2_ref[...]        # (Nb, C)
        y = jax.nn.sigmoid(y)
        # Re-read x and rescale in the I/O dtype (exact for f32; bf16 on
        # v6e/v7x halves the vld/vmul/vst count of the dominant loop).
        o_ref[...] = (x_ref[...] * y.astype(o_ref.dtype)[:, :, None]).astype(o_ref.dtype)
    return kernel


def _make_pool_se_kernel(inv_hw, hw, thw):
    mask_tail = (hw % thw) != 0

    def kernel(x_ref, w1_ref, b1_ref, w2_ref, b2_ref, y_ref, acc_ref):
        # Pass A of the two-pass fallback.
        # x_ref: (C, thw) spatial tile; acc_ref: (C, 1) f32 running sum.
        # NOTE: correctness requires the spatial-tile axis to be the INNERMOST
        # grid axis and marked "arbitrary" (per-core scratch accumulator).
        t = pl.program_id(1)

        @pl.when(t == 0)
        def _():
            acc_ref[...] = jnp.zeros_like(acc_ref)

        xf = x_ref[...].astype(jnp.float32)
        if mask_tail:
            # The last tile extends past HW; those lanes hold stale VMEM -> mask.
            lane = jax.lax.broadcasted_iota(jnp.int32, xf.shape, 1) + t * thw
            xf = jnp.where(lane < hw, xf, 0.0)
        acc_ref[...] += jnp.sum(xf, axis=-1, keepdims=True)

        @pl.when(t == pl.num_programs(1) - 1)
        def _():
            pooled = acc_ref[...] * inv_hw                                   # (C, 1)
            h = jnp.dot(w1_ref[...], pooled,
                        preferred_element_type=jnp.float32) + b1_ref[...]    # (Cr, 1)
            h = jnp.maximum(h, 0.0)
            y = jnp.dot(w2_ref[...], h,
                        preferred_element_type=jnp.float32) + b2_ref[...]    # (C, 1)
            y_ref[...] = jax.nn.sigmoid(y)
    return kernel


def _scale_kernel(y_ref, x_ref, o_ref):
    # Pass B: broadcast channel rescale over an HW tile, done in the I/O dtype.
    # y_ref: (C, 1) f32, x_ref/o_ref: (C, thw)
    o_ref[...] = (x_ref[...] * y_ref[...].astype(o_ref.dtype)).astype(o_ref.dtype)


# ---------------------------------------------------------------------------
# Block-size helpers
# ---------------------------------------------------------------------------
def _pick_batch_block(n, per_batch_bytes, per_batch_cost, vmem_budget):
    """Batch rows per fused grid step."""
    cap = min(n, max(1, int(vmem_budget // max(per_batch_cost, 1))))
    # Target >= _TARGET_STEPS grid steps (pipeline steady state)...
    nb = max(1, n // _TARGET_STEPS)
    # ...as long as each block stays above ~1 MiB.
    if nb * per_batch_bytes < _MIN_STEP_BYTES:
        nb = min(n, max(nb, -(-_MIN_STEP_BYTES // per_batch_bytes)))
    # Keep >= 2 steps whenever n >= 2 so both v7x TensorCores get work.
    if n >= 2:
        nb = min(nb, n // 2)
    nb = max(1, min(nb, cap))
    for d in range(nb, 0, -1):          # largest divisor of n <= nb (exact grid)
        if n % d == 0:
            return d
    return 1


def _pick_hw_tile(hw, c, itemsize, target_bytes, cap=None):
    """Spatial tile: multiple of 128, sized by the budget; no divisibility
    requirement (the grid uses pl.cdiv and the pool masks the ragged tail)."""
    per_lane = c * max(4, itemsize)     # I/O tile + f32 temp for the pool
    max_thw = max(_LANE, (target_bytes // per_lane) // _LANE * _LANE)
    hw_up = -(-hw // _LANE) * _LANE
    thw = min(max_thw, hw_up)
    if cap is not None:
        thw = min(thw, max(_LANE, (cap // _LANE) * _LANE))
    return max(_LANE, thw)


# ---------------------------------------------------------------------------
# Wrapper
# ---------------------------------------------------------------------------
def ca_layer(x, w1, b1, w2, b2, *, force_two_pass=False, _max_hw_tile=None):
    """Channel-attention forward (CALayer).

    x : (N, C, H, W)  float32 or bfloat16 (NCHW, as in the PyTorch module)
    w1: (C//r, C), b1: (C//r,)   -- first 1x1 conv (bias=True)
    w2: (C, C//r), b2: (C,)      -- second 1x1 conv (bias=True)
    returns (N, C, H, W) in x.dtype
    """
    N, C, H, W = x.shape
    Cr = w1.shape[0]
    HW = H * W
    itemsize = jnp.dtype(x.dtype).itemsize
    inv_hw = 1.0 / float(HW)

    # Flat (N, C, HW) view; a reshape of contiguous NCHW is free.  No padding.
    x2 = x.reshape(N, C, HW)

    w1 = w1.astype(jnp.float32)
    b1 = b1.astype(jnp.float32)
    w2 = w2.astype(jnp.float32)
    b2 = b2.astype(jnp.float32)

    target_block, vmem_ceil = _budgets()
    weight_bytes = 4 * (2 * C * Cr + C + Cr)
    overhead = 4 * weight_bytes + 2 * _MIB
    vmem_budget = max(vmem_ceil - overhead, 8 * _MIB)

    per_batch_bytes = C * HW * itemsize
    # VMEM cost of one batch row in the fused pipeline: 2 input + 2 output
    # copies, plus (for sub-32-bit I/O) one f32-sized temp from the pool cast.
    f32_extra = per_batch_bytes * (4 // itemsize) if itemsize < 4 else 0
    per_batch_cost = 4 * per_batch_bytes + f32_extra

    can_fuse = per_batch_bytes <= target_block and per_batch_cost <= vmem_budget
    use_fused = can_fuse and (not force_two_pass or HW < _LANE)

    nb = 1
    if use_fused:
        nb = _pick_batch_block(N, per_batch_bytes, per_batch_cost, vmem_budget)
        # A 1-step fused grid has zero DMA/compute overlap and idles one v7x
        # TensorCore; for big single images prefer the HW-tiled two-pass path.
        if (N // nb) == 1 and per_batch_bytes >= 2 * _MIB and HW >= 4 * _LANE:
            thw_probe = _pick_hw_tile(HW, C, itemsize, target_block, _max_hw_tile)
            if pl.cdiv(HW, thw_probe) >= 4:
                use_fused = False

    if use_fused:
        vmem_need = nb * per_batch_cost + overhead
        out = pl.pallas_call(
            _make_fused_kernel(inv_hw),
            out_shape=jax.ShapeDtypeStruct((N, C, HW), x.dtype),
            grid_spec=pltpu.PrefetchScalarGridSpec(
                num_scalar_prefetch=0,
                grid=(N // nb,),
                in_specs=[
                    pl.BlockSpec((nb, C, HW), lambda i: (i, 0, 0)),
                    pl.BlockSpec((C, Cr), lambda i: (0, 0)),
                    pl.BlockSpec((1, Cr), lambda i: (0, 0)),
                    pl.BlockSpec((Cr, C), lambda i: (0, 0)),
                    pl.BlockSpec((1, C), lambda i: (0, 0)),
                ],
                out_specs=pl.BlockSpec((nb, C, HW), lambda i: (i, 0, 0)),
            ),
            compiler_params=pltpu.CompilerParams(
                dimension_semantics=("parallel",),
                vmem_limit_bytes=_clamp_vmem(vmem_need, vmem_ceil)),
        )(x2, w1.T, b1.reshape(1, Cr), w2.T, b2.reshape(1, C))
    else:
        # Two-pass fallback: HW-tiled pool+SE, then HW-tiled rescale.
        tile_budget = min(target_block, max(2 * _MIB, (vmem_ceil - overhead) // 5))
        thw = _pick_hw_tile(HW, C, itemsize, tile_budget, _max_hw_tile)
        n_t = pl.cdiv(HW, thw)
        tile_bytes = C * thw * itemsize
        small = overhead + 16 * C * 4

        y = pl.pallas_call(
            _make_pool_se_kernel(inv_hw, HW, thw),
            out_shape=jax.ShapeDtypeStruct((N, C, 1), jnp.float32),
            grid_spec=pltpu.PrefetchScalarGridSpec(
                num_scalar_prefetch=0,
                # The spatial-tile (reduction) axis MUST stay innermost and
                # "arbitrary" for the scratch accumulator to be correct.
                grid=(N, n_t),
                in_specs=[
                    pl.BlockSpec((pl.Squeezed(), C, thw), lambda n, t: (n, 0, t)),
                    pl.BlockSpec((Cr, C), lambda n, t: (0, 0)),
                    pl.BlockSpec((Cr, 1), lambda n, t: (0, 0)),
                    pl.BlockSpec((C, Cr), lambda n, t: (0, 0)),
                    pl.BlockSpec((C, 1), lambda n, t: (0, 0)),
                ],
                out_specs=pl.BlockSpec((pl.Squeezed(), C, 1),
                                       lambda n, t: (n, 0, 0)),
                scratch_shapes=[pltpu.VMEM((C, 1), jnp.float32)],
            ),
            compiler_params=pltpu.CompilerParams(
                dimension_semantics=("parallel", "arbitrary"),
                vmem_limit_bytes=_clamp_vmem(
                    2 * tile_bytes + C * thw * 4 + small, vmem_ceil)),
        )(x2, w1, b1.reshape(Cr, 1), w2, b2.reshape(C, 1))

        out = pl.pallas_call(
            _scale_kernel,
            out_shape=jax.ShapeDtypeStruct((N, C, HW), x.dtype),
            grid_spec=pltpu.PrefetchScalarGridSpec(
                num_scalar_prefetch=0,
                grid=(N, n_t),
                in_specs=[
                    pl.BlockSpec((pl.Squeezed(), C, 1), lambda n, t: (n, 0, 0)),
                    pl.BlockSpec((pl.Squeezed(), C, thw), lambda n, t: (n, 0, t)),
                ],
                out_specs=pl.BlockSpec((pl.Squeezed(), C, thw),
                                       lambda n, t: (n, 0, t)),
            ),
            compiler_params=pltpu.CompilerParams(
                dimension_semantics=("parallel", "parallel"),
                vmem_limit_bytes=_clamp_vmem(4 * tile_bytes + small, vmem_ceil)),
        )(y, x2)

    return out.reshape(N, C, H, W)


def ca_layer_ref(x, w1, b1, w2, b2):
    # Pure-JAX reference for correctness checking.
    pooled = jnp.mean(x.astype(jnp.float32), axis=(2, 3))          # (N, C)
    h = jnp.maximum(pooled @ w1.T + b1, 0.0)                       # (N, Cr)
    y = jax.nn.sigmoid(h @ w2.T + b2)                              # (N, C)
    return (x.astype(jnp.float32) * y[:, :, None, None]).astype(x.dtype)


if __name__ == "__main__":
    # Small, CALayer-consistent shapes: channel=32, reduction=4 -> hidden=8.
    N, C, H, W = 2, 32, 16, 16
    reduction = 4
    Cr = C // reduction

    key = jax.random.PRNGKey(0)
    kx, k1, kb1, k2, kb2 = jax.random.split(key, 5)
    x = jax.random.normal(kx, (N, C, H, W), dtype=jnp.float32)
    # Deterministic synthetic parameters (Conv2d 1x1 weights flattened to 2D).
    w1 = jax.random.normal(k1, (Cr, C), dtype=jnp.float32) * 0.1
    b1 = jax.random.normal(kb1, (Cr,), dtype=jnp.float32) * 0.1
    w2 = jax.random.normal(k2, (C, Cr), dtype=jnp.float32) * 0.1
    b2 = jax.random.normal(kb2, (C,), dtype=jnp.float32) * 0.1

    ref = ca_layer_ref(x, w1, b1, w2, b2)

    # 1) Fused single-pass path (x read exactly once from HBM).
    out = jax.block_until_ready(ca_layer(x, w1, b1, w2, b2))
    assert out.shape == (N, C, H, W)
    assert jnp.allclose(out, ref, atol=1e-5, rtol=1e-5), "fused path mismatch"

    # 2) Two-pass fallback with a multi-tile reduction (thw=128 -> 2 tiles).
    out2 = jax.block_until_ready(
        ca_layer(x, w1, b1, w2, b2, force_two_pass=True, _max_hw_tile=128))
    assert jnp.allclose(out2, ref, atol=1e-5, rtol=1e-5), "two-pass mismatch"

    # 3) Non-128-multiple spatial, fused path: no wrapper pad/slice, Mosaic
    #    masks the ragged last vreg; pool divides by the true HW.
    x7 = jax.random.normal(kx, (N, C, 7, 7), dtype=jnp.float32)
    ref7 = ca_layer_ref(x7, w1, b1, w2, b2)
    out7 = jax.block_until_ready(ca_layer(x7, w1, b1, w2, b2))
    assert jnp.allclose(out7, ref7, atol=1e-5, rtol=1e-5), "ragged fused mismatch"

    # 4) Non-128-multiple spatial, two-pass path: HW=289 with thw=128 -> 3
    #    tiles, the last one masked (stale lanes) in the pool kernel.
    x17 = jax.random.normal(kx, (N, C, 17, 17), dtype=jnp.float32)
    ref17 = ca_layer_ref(x17, w1, b1, w2, b2)
    out17 = jax.block_until_ready(
        ca_layer(x17, w1, b1, w2, b2, force_two_pass=True, _max_hw_tile=128))
    assert jnp.allclose(out17, ref17, atol=1e-5, rtol=1e-5), "ragged two-pass mismatch"

    # 5) bf16 I/O: the rescale runs in bf16 on the VPU; compare with bf16 tol.
    xb = x.astype(jnp.bfloat16)
    refb = ca_layer_ref(xb, w1, b1, w2, b2).astype(jnp.float32)
    outb = jax.block_until_ready(ca_layer(xb, w1, b1, w2, b2)).astype(jnp.float32)
    assert jnp.allclose(outb, refb, atol=3e-2, rtol=3e-2), "bf16 fused mismatch"

    print("KERNEL_OK")
</pallas_src>

<mosaic_0001>
module attributes {stable_mosaic.version = 11 : i64} {
  func.func @kernel(%arg0: i32, %arg1: memref<1x32x256xf32, #tpu.memory_space<vmem>>, %arg2: memref<32x8xf32, #tpu.memory_space<vmem>>, %arg3: memref<1x8xf32, #tpu.memory_space<vmem>>, %arg4: memref<8x32xf32, #tpu.memory_space<vmem>>, %arg5: memref<1x32xf32, #tpu.memory_space<vmem>>, %arg6: memref<1x32x256xf32, #tpu.memory_space<vmem>>) attributes {dimension_semantics = [#tpu.dimension_semantics<parallel>], iteration_bounds = array<i64: 2>, scalar_prefetch = 0 : i64, scratch_operands = 0 : i64, tpu.core_type = #tpu.core_type<tc>, window_params = [{transform_indices = @transform_0, window_bounds = array<i64: 1, 32, 256>}, {pipeline_mode = #tpu.pipeline_mode<synchronous>, transform_indices = @transform_1, window_bounds = array<i64: 32, 8>}, {pipeline_mode = #tpu.pipeline_mode<synchronous>, transform_indices = @transform_2, window_bounds = array<i64: 1, 8>}, {pipeline_mode = #tpu.pipeline_mode<synchronous>, transform_indices = @transform_3, window_bounds = array<i64: 8, 32>}, {pipeline_mode = #tpu.pipeline_mode<synchronous>, transform_indices = @transform_4, window_bounds = array<i64: 1, 32>}, {transform_indices = @transform_5, window_bounds = array<i64: 1, 32, 256>}]} {
    %c0 = arith.constant 0 : index
    %c0_0 = arith.constant 0 : index
    %c0_1 = arith.constant 0 : index
    %0 = vector.load %arg1[%c0, %c0_0, %c0_1] : memref<1x32x256xf32, #tpu.memory_space<vmem>>, vector<1x32x256xf32>
    %cst = arith.constant dense<0.000000e+00> : vector<1x32xf32>
    %1 = vector.multi_reduction <add>, %0, %cst [2] : vector<1x32x256xf32> to vector<1x32xf32>
    %cst_2 = arith.constant 3.906250e-03 : f32
    %2 = vector.broadcast %cst_2 : f32 to vector<1x32xf32>
    %3 = arith.mulf %1, %2 : vector<1x32xf32>
    %c0_3 = arith.constant 0 : index
    %c0_4 = arith.constant 0 : index
    %4 = vector.load %arg2[%c0_3, %c0_4] : memref<32x8xf32, #tpu.memory_space<vmem>>, vector<32x8xf32>
    %cst_5 = arith.constant dense<0.000000e+00> : vector<1x8xf32>
    %5 = tpu.matmul %3, %4, %cst_5 {dimension_numbers = #tpu.dot_dimension_numbers<[1], [0], [0], [1], [0, 0, 1, 1], [], []>} : vector<1x32xf32>, vector<32x8xf32>, vector<1x8xf32> -> vector<1x8xf32>
    %c0_6 = arith.constant 0 : index
    %c0_7 = arith.constant 0 : index
    %6 = vector.load %arg3[%c0_6, %c0_7] : memref<1x8xf32, #tpu.memory_space<vmem>>, vector<1x8xf32>
    %7 = arith.addf %5, %6 : vector<1x8xf32>
    %cst_8 = arith.constant 0.000000e+00 : f32
    %8 = vector.broadcast %cst_8 : f32 to vector<1x8xf32>
    %9 = arith.maximumf %7, %8 : vector<1x8xf32>
    %c0_9 = arith.constant 0 : index
    %c0_10 = arith.constant 0 : index
    %10 = vector.load %arg4[%c0_9, %c0_10] : memref<8x32xf32, #tpu.memory_space<vmem>>, vector<8x32xf32>
    %cst_11 = arith.constant dense<0.000000e+00> : vector<1x32xf32>
    %11 = tpu.matmul %9, %10, %cst_11 {dimension_numbers = #tpu.dot_dimension_numbers<[1], [0], [0], [1], [0, 0, 1, 1], [], []>} : vector<1x8xf32>, vector<8x32xf32>, vector<1x32xf32> -> vector<1x32xf32>
    %c0_12 = arith.constant 0 : index
    %c0_13 = arith.constant 0 : index
    %12 = vector.load %arg5[%c0_12, %c0_13] : memref<1x32xf32, #tpu.memory_space<vmem>>, vector<1x32xf32>
    %13 = arith.addf %11, %12 : vector<1x32xf32>
    %14 = arith.negf %13 : vector<1x32xf32>
    %15 = math.exp %14 : vector<1x32xf32>
    %cst_14 = arith.constant 1.000000e+00 : f32
    %16 = vector.broadcast %cst_14 : f32 to vector<1x32xf32>
    %17 = arith.addf %16, %15 : vector<1x32xf32>
    %18 = arith.divf %16, %17 : vector<1x32xf32>
    %c0_15 = arith.constant 0 : index
    %c0_16 = arith.constant 0 : index
    %c0_17 = arith.constant 0 : index
    %19 = vector.load %arg1[%c0_15, %c0_16, %c0_17] : memref<1x32x256xf32, #tpu.memory_space<vmem>>, vector<1x32x256xf32>
    %20 = vector.shape_cast %18 : vector<1x32xf32> to vector<1x32x1xf32>
    %21 = vector.broadcast %20 : vector<1x32x1xf32> to vector<1x32x256xf32>
    %22 = arith.mulf %19, %21 : vector<1x32x256xf32>
    %c0_18 = arith.constant 0 : index
    %c0_19 = arith.constant 0 : index
    %c0_20 = arith.constant 0 : index
    %23 = vector.load %arg6[%c0_18, %c0_19, %c0_20] : memref<1x32x256xf32, #tpu.memory_space<vmem>>, vector<1x32x256xf32>
    tpu.vector_store %arg6[%c0_18, %c0_19, %c0_20], %22 {strides = array<i32>} : memref<1x32x256xf32, #tpu.memory_space<vmem>>, vector<1x32x256xf32>,
    return
  }
  func.func @transform_0(%arg0: i32) -> (i32, i32, i32) {
    %c0_i32 = arith.constant 0 : i32
    %c0_i32_0 = arith.constant 0 : i32
    %c0_i32_1 = arith.constant 0 : i32
    return %arg0, %c0_i32, %c0_i32_0 : i32, i32, i32
  }
  func.func @transform_1(%arg0: i32) -> (i32, i32) {
    %c0_i32 = arith.constant 0 : i32
    %c0_i32_0 = arith.constant 0 : i32
    %c0_i32_1 = arith.constant 0 : i32
    return %c0_i32, %c0_i32_0 : i32, i32
  }
  func.func @transform_2(%arg0: i32) -> (i32, i32) {
    %c0_i32 = arith.constant 0 : i32
    %c0_i32_0 = arith.constant 0 : i32
    %c0_i32_1 = arith.constant 0 : i32
    return %c0_i32, %c0_i32_0 : i32, i32
  }
  func.func @transform_3(%arg0: i32) -> (i32, i32) {
    %c0_i32 = arith.constant 0 : i32
    %c0_i32_0 = arith.constant 0 : i32
    %c0_i32_1 = arith.constant 0 : i32
    return %c0_i32, %c0_i32_0 : i32, i32
  }
  func.func @transform_4(%arg0: i32) -> (i32, i32) {
    %c0_i32 = arith.constant 0 : i32
    %c0_i32_0 = arith.constant 0 : i32
    %c0_i32_1 = arith.constant 0 : i32
    return %c0_i32, %c0_i32_0 : i32, i32
  }
  func.func @transform_5(%arg0: i32) -> (i32, i32, i32) {
    %c0_i32 = arith.constant 0 : i32
    %c0_i32_0 = arith.constant 0 : i32
    %c0_i32_1 = arith.constant 0 : i32
    return %arg0, %c0_i32, %c0_i32_0 : i32, i32, i32
  }
}

</mosaic_0001>

<llo_original>
// kernel: tpu_custom_call.1
$region0: #{tpu_custom_call.1}
  #allocation0 [shape = 'u32[]', space=smem, size = 0x4, offset = 0x4, fixed_abs, tag = 'smem constant byte address 0x4 - core index']
  #allocation1 [shape = 'u32[144,128]{1,0:T(1,128)}', space=vmem, size = 0x12000, scoped, tag = 'internal scratch']
  %s0 = inlined_call_operand.hbm [shape: f32[2,32,256], index: 0, kind: input, shape index: {}]
  %s1 = inlined_call_operand.vmem [shape: f32[32,8], index: 1, kind: input, shape index: {}]
  %s2 = inlined_call_operand.vmem [shape: f32[1,8], index: 2, kind: input, shape index: {}]
  %s3 = inlined_call_operand.vmem [shape: f32[8,32], index: 3, kind: input, shape index: {}]
  %s4 = inlined_call_operand.vmem [shape: f32[1,32], index: 4, kind: input, shape index: {}]
  %s5 = inlined_call_operand.hbm [shape: f32[2,32,256], index: 5, kind: output, shape index: {}]
  %s6 = sld [smem:[#allocation0]]
  $region57: #{tpu_custom_call.1} parent=0
    _
  %s8 = ssub.s32 1, %s6
  %s9 = scalar_select 0, %s8, %s6
  $region1: #{tpu_custom_call.1} parent=0
    #allocation2 [shape = 'u8[65536]{0}', space=vmem, size = 0x10000, scoped, tag = 'input window, operand 0']
    #allocation3 [shape = 's32[2]{0}', space=sflag, size = 0x8, scoped, tag = 'scoped memory for tpu_custom_call.1']
    #allocation4 [shape = 's32[2]{0}', space=sflag, size = 0x8, scoped, tag = 'scoped memory for tpu_custom_call.1']
    #allocation5 [shape = 'u8[65536]{0}', space=vmem, size = 0x10000, scoped, tag = 'output window, operand 0']
    %10 = vsyncpa [#allocation3], 0
    %s11 = scalar_lea.sflag [#allocation3], 1
    %12 = vsyncpa %s11, 0
    %13 = vsyncpa [#allocation4], 0
    %s14 = scalar_lea.sflag [#allocation4], 1
    %15 = vsyncpa %s14, 0
    loop: start=0, step=1, limit=4
    $region2: #{tpu_custom_call.1} parent=1 // loop_pre_header
      _
    $region3: #{tpu_custom_call.1} parent=1 // loop_header
      %s17 = sphi 0, %s21
      %p18 = scmp.ge.s32.totalorder %s17, 4
      %s27 = sphi 0, %s29
      %s30 = sphi 0, %s27
      %s31 = sphi 0, %s30
      %s47 = sphi 0, %s31
      %s51 = sphi 0, %s51
      %s53 = sphi 0, %s51
      %s54 = sphi 0, %s53
      %s68 = sphi 0, %s54
      %s72 = sphi 0, %s72
      %s74 = sphi 0, %s72
      %s75 = sphi 0, %s74
      %s89 = sphi 0, %s75
      %s93 = sphi 0, %s93
      %s95 = sphi 0, %s93
      %s96 = sphi 0, %s95
      %s110 = sphi 0, %s96
      %s114 = sphi 0, %s114
      %s116 = sphi 0, %s114
      %s117 = sphi 0, %s116
      %s131 = sphi 0, %s117
      %s137 = sphi 0, %s139
      %s140 = sphi 0, %s137
      %s141 = sphi 0, %s140
      %s157 = sphi 0, %s141
    $region4: #{tpu_custom_call.1} parent=1 // loop_header_branch
      %20 = sbr.rel (%p18) target = $region8
    $region5: #{tpu_custom_call.1} parent=1 // loop_body
      %s22 = ssub.s32 %s17, 1
      %s23 = ssub.s32 %s17, 2
      %s24 = sadd.s32 %s17, 1
      %s25 = ssub.s32 %s17, %s24
      %p26 = scmp.eq.s32.totalorder %s25, 0
      %s28 = sadd.s32 %s27, 1
      %s29 = scalar_select %p26, %s27, %s28
      %p32 = pneg %p26
      %p33 = scmp.eq.s32.totalorder %s17, 1
      %p34 = por %p32, %p33
      %p35 = scmp.ne.s32.totalorder %s27, %s30
      %p36 = scmp.eq.s32.totalorder %s17, 0
      %p37 = por %p35, %p36
      %p38 = scmp.ne.s32.totalorder %s27, %s30
      %p39 = scmp.eq.s32.totalorder %s22, 1
      %p40 = por %p38, %p39
      %p41 = scmp.ne.s32.totalorder %s30, %s31
      %p42 = scmp.eq.s32.totalorder %s22, 0
      %p43 = por %p41, %p42
      %p44 = scmp.ne.s32.totalorder %s30, %s31
      %p45 = scmp.eq.s32.totalorder %s23, 1
      %p46 = por %p44, %p45
      %p48 = scmp.ne.s32.totalorder %s31, %s47
      %p49 = scmp.eq.s32.totalorder %s23, 0
      %p50 = por %p48, %p49
      %s52 = sadd.s32 %s51, 1
      %p55 = scmp.eq.s32.totalorder %s17, 1
      %p56 = scmp.ne.s32.totalorder %s51, %s53
      %p57 = scmp.eq.s32.totalorder %s17, 0
      %p58 = por %p56, %p57
      %p59 = scmp.ne.s32.totalorder %s51, %s53
      %p60 = scmp.eq.s32.totalorder %s22, 1
      %p61 = por %p59, %p60
      %p62 = scmp.ne.s32.totalorder %s53, %s54
      %p63 = scmp.eq.s32.totalorder %s22, 0
      %p64 = por %p62, %p63
      %p65 = scmp.ne.s32.totalorder %s53, %s54
      %p66 = scmp.eq.s32.totalorder %s23, 1
      %p67 = por %p65, %p66
      %p69 = scmp.ne.s32.totalorder %s54, %s68
      %p70 = scmp.eq.s32.totalorder %s23, 0
      %p71 = por %p69, %p70
      %s73 = sadd.s32 %s72, 1
      %p76 = scmp.eq.s32.totalorder %s17, 1
      %p77 = scmp.ne.s32.totalorder %s72, %s74
      %p78 = scmp.eq.s32.totalorder %s17, 0
      %p79 = por %p77, %p78
      %p80 = scmp.ne.s32.totalorder %s72, %s74
      %p81 = scmp.eq.s32.totalorder %s22, 1
      %p82 = por %p80, %p81
      %p83 = scmp.ne.s32.totalorder %s74, %s75
      %p84 = scmp.eq.s32.totalorder %s22, 0
      %p85 = por %p83, %p84
      %p86 = scmp.ne.s32.totalorder %s74, %s75
      %p87 = scmp.eq.s32.totalorder %s23, 1
      %p88 = por %p86, %p87
      %p90 = scmp.ne.s32.totalorder %s75, %s89
      %p91 = scmp.eq.s32.totalorder %s23, 0
      %p92 = por %p90, %p91
      %s94 = sadd.s32 %s93, 1
      %p97 = scmp.eq.s32.totalorder %s17, 1
      %p98 = scmp.ne.s32.totalorder %s93, %s95
      %p99 = scmp.eq.s32.totalorder %s17, 0
      %p100 = por %p98, %p99
      %p101 = scmp.ne.s32.totalorder %s93, %s95
      %p102 = scmp.eq.s32.totalorder %s22, 1
      %p103 = por %p101, %p102
      %p104 = scmp.ne.s32.totalorder %s95, %s96
      %p105 = scmp.eq.s32.totalorder %s22, 0
      %p106 = por %p104, %p105
      %p107 = scmp.ne.s32.totalorder %s95, %s96
      %p108 = scmp.eq.s32.totalorder %s23, 1
      %p109 = por %p107, %p108
      %p111 = scmp.ne.s32.totalorder %s96, %s110
      %p112 = scmp.eq.s32.totalorder %s23, 0
      %p113 = por %p111, %p112
      %s115 = sadd.s32 %s114, 1
      %p118 = scmp.eq.s32.totalorder %s17, 1
      %p119 = scmp.ne.s32.totalorder %s114, %s116
      %p120 = scmp.eq.s32.totalorder %s17, 0
      %p121 = por %p119, %p120
      %p122 = scmp.ne.s32.totalorder %s114, %s116
      %p123 = scmp.eq.s32.totalorder %s22, 1
      %p124 = por %p122, %p123
      %p125 = scmp.ne.s32.totalorder %s116, %s117
      %p126 = scmp.eq.s32.totalorder %s22, 0
      %p127 = por %p125, %p126
      %p128 = scmp.ne.s32.totalorder %s116, %s117
      %p129 = scmp.eq.s32.totalorder %s23, 1
      %p130 = por %p128, %p129
      %p132 = scmp.ne.s32.totalorder %s117, %s131
      %p133 = scmp.eq.s32.totalorder %s23, 0
      %p134 = por %p132, %p133
      %s135 = ssub.s32 %s17, %s24
      %p136 = scmp.eq.s32.totalorder %s135, 0
      %s138 = sadd.s32 %s137, 1
      %s139 = scalar_select %p136, %s137, %s138
      %p142 = pneg %p136
      %p143 = scmp.eq.s32.totalorder %s17, 1
      %p144 = por %p142, %p143
      %p145 = scmp.ne.s32.totalorder %s137, %s140
      %p146 = scmp.eq.s32.totalorder %s17, 0
      %p147 = por %p145, %p146
      %p148 = scmp.ne.s32.totalorder %s137, %s140
      %p149 = scmp.eq.s32.totalorder %s22, 1
      %p150 = por %p148, %p149
      %p151 = scmp.ne.s32.totalorder %s140, %s141
      %p152 = scmp.eq.s32.totalorder %s22, 0
      %p153 = por %p151, %p152
      %p154 = scmp.ne.s32.totalorder %s140, %s141
      %p155 = scmp.eq.s32.totalorder %s23, 1
      %p156 = por %p154, %p155
      %p158 = scmp.ne.s32.totalorder %s141, %s157
      %p159 = scmp.eq.s32.totalorder %s23, 0
      %p160 = por %p158, %p159
      %p161 = scmp.le.s32.totalorder 1, %s17
      %p162 = scmp.lt.s32.totalorder %s17, 3
      %p163 = pnand %p161, %p162
      %p164 = pneg %p163
      // Predicated region
      $region9: #{tpu_custom_call.1} parent=5 // pred_check
        _
      $region10: #{tpu_custom_call.1} parent=5 // pred_check_branch
        %166 = sbr.rel (%p163) target = $region12
      $region11: #{tpu_custom_call.1} parent=5 // pred_region
        %s167 = ssub.s32 %s17, 1
        // Predicated region
        $region13: #{tpu_custom_call.1} parent=11 // pred_check
          %p168 = pneg %p64
        $region14: #{tpu_custom_call.1} parent=11 // pred_check_branch
          %170 = sbr.rel (%p168) target = $region16
        $region15: #{tpu_custom_call.1} parent=11 // pred_region
          _
        $region16: #{tpu_custom_call.1} parent=11 // pred_fallthru
          _
        // Predicated region
        $region17: #{tpu_custom_call.1} parent=11 // pred_check
          %p171 = pneg %p85
        $region18: #{tpu_custom_call.1} parent=11 // pred_check_branch
          %173 = sbr.rel (%p171) target = $region20
        $region19: #{tpu_custom_call.1} parent=11 // pred_region
          _
        $region20: #{tpu_custom_call.1} parent=11 // pred_fallthru
          _
        // Predicated region
        $region21: #{tpu_custom_call.1} parent=11 // pred_check
          %p174 = pneg %p106
        $region22: #{tpu_custom_call.1} parent=11 // pred_check_branch
          %176 = sbr.rel (%p174) target = $region24
        $region23: #{tpu_custom_call.1} parent=11 // pred_region
          _
        $region24: #{tpu_custom_call.1} parent=11 // pred_fallthru
          _
        // Predicated region
        $region25: #{tpu_custom_call.1} parent=11 // pred_check
          %p177 = pneg %p127
        $region26: #{tpu_custom_call.1} parent=11 // pred_check_branch
          %179 = sbr.rel (%p177) target = $region28
        $region27: #{tpu_custom_call.1} parent=11 // pred_region
          _
        $region28: #{tpu_custom_call.1} parent=11 // pred_fallthru
          _
      $region12: #{tpu_custom_call.1} parent=5 // pred_fallthru
        _
      %p180 = scmp.lt.s32.totalorder %s17, 2
      // Predicated region
      $region29: #{tpu_custom_call.1} parent=5 // pred_check
        %p181 = pneg %p180
      $region30: #{tpu_custom_call.1} parent=5 // pred_check_branch
        %183 = sbr.rel (%p181) target = $region32
      $region31: #{tpu_custom_call.1} parent=5 // pred_region
        // Predicated region
        $region33: #{tpu_custom_call.1} parent=31 // pred_check
          %p184 = pneg %p37
        $region34: #{tpu_custom_call.1} parent=31 // pred_check_branch
          %186 = sbr.rel (%p184) target = $region36
        $region35: #{tpu_custom_call.1} parent=31 // pred_region
          %s187 = sand.u32 %s27, 1
          %s188 = scalar_lea.sflag [#allocation3], %s187
          %s189 = sand.u32 %s27, 1
          %s190 = smul.addr %s189, 64
          %s191 = scalar_lea.vmem [#allocation2], %s190
          %s193 = ssub.s32 1024, 1024
          %194 = vsyncadd %s188, %s193
          %s195 = smul.addr %s17, 8
          %s196 = smul.addr %s195, 128
          %s197 = scalar_lea.hbm %s0, %s196
          %s198 = sshll.u32 %s191, 4
          %s199 = int_to_ptr.vmem [resolvable:$true] %s198
          %204 = dma.hbm_to_vmem [thread:$0]  %s197, 1024, %s199, %s188, 256, 256, 16
        $region36: #{tpu_custom_call.1} parent=31 // pred_fallthru
          _
      $region32: #{tpu_custom_call.1} parent=5 // pred_fallthru
        _
      %p205 = scmp.le.s32.totalorder 1, %s17
      %p206 = scmp.lt.s32.totalorder %s17, 3
      %p207 = pnand %p205, %p206
      %p208 = pneg %p207
      // Predicated region
      $region37: #{tpu_custom_call.1} parent=5 // pred_check
        _
      $region38: #{tpu_custom_call.1} parent=5 // pred_check_branch
        %210 = sbr.rel (%p207) target = $region40
      $region39: #{tpu_custom_call.1} parent=5 // pred_region
        %s211 = ssub.s32 %s17, 1
        %s212 = sand.u32 %s30, 1
        %s213 = scalar_lea.sflag [#allocation3], %s212
        %s214 = sand.u32 %s30, 1
        %s215 = smul.addr %s214, 64
        %s216 = scalar_lea.vmem [#allocation2], %s215
        // Predicated region
        $region41: #{tpu_custom_call.1} parent=39 // pred_check
          %p217 = pneg %p43
        $region42: #{tpu_custom_call.1} parent=39 // pred_check_branch
          %219 = sbr.rel (%p217) target = $region44
        $region43: #{tpu_custom_call.1} parent=39 // pred_region
          %220 = dma.done %s213, 1024
        $region44: #{tpu_custom_call.1} parent=39 // pred_fallthru
          _
        %s221 = sand.u32 %s30, 1
        %s222 = scalar_lea.sflag [#allocation3], %s221
        %s223 = sand.u32 %s30, 1
        %s224 = smul.addr %s223, 64
        %s225 = scalar_lea.vmem [#allocation2], %s224
        %p226 = pneg %p43
        %p227 = pneg %p40
        %p228 = pneg %p64
        %p229 = pneg %p61
        %p230 = pneg %p85
        %p231 = pneg %p82
        %p232 = pneg %p106
        %p233 = pneg %p103
        %p234 = pneg %p127
        %p235 = pneg %p124
        %p236 = pneg %p153
        %p237 = pneg %p150
        %s238 = sand.u32 %s140, 1
        %s239 = scalar_lea.sflag [#allocation4], %s238
        %s240 = sand.u32 %s140, 1
        %s241 = smul.addr %s240, 64
        %s242 = scalar_lea.vmem [#allocation5], %s241
        %v243 = vld [vmem:[%s216] sm:$0xff]
        %v244 = vld [vmem:[%s216 + $0x8] sm:$0xff]
        %v245 = vld [vmem:[%s216 + $0x10] sm:$0xff]
        %v246 = vld [vmem:[%s216 + $0x18] sm:$0xff]
        %v247 = vld [vmem:[%s216 + $0x20] sm:$0xff]
        %v248 = vld [vmem:[%s216 + $0x28] sm:$0xff]
        %v249 = vld [vmem:[%s216 + $0x30] sm:$0xff]
        %v250 = vld [vmem:[%s216 + $0x38] sm:$0xff]
        %v251 = vadd.f32 %v243, %v244
        %252 = vadd.xlane.f32.xlu0 %v251
        %v253 = vpop.xlane.xlu0 %252
        %v254 = vadd.f32 %v245, %v246
        %255 = vadd.xlane.f32.xlu0 %v254
        %v256 = vpop.xlane.xlu0 %255
        %v257 = vadd.f32 %v247, %v248
        %258 = vadd.xlane.f32.xlu0 %v257
        %v259 = vpop.xlane.xlu0 %258
        %v260 = vadd.f32 %v249, %v250
        %261 = vadd.xlane.f32.xlu0 %v260
        %v262 = vpop.xlane.xlu0 %261
        %v263 = vmul.f32 %v253, 0.00390625
        %v264 = vmul.f32 %v256, 0.00390625
        %v265 = vmul.f32 %v259, 0.00390625
        %v266 = vmul.f32 %v262, 0.00390625
        %v267 = vld [vmem:[%s1] sm:$0xff]
        %v268 = vld [vmem:[%s1 + $0x8] sm:$0xff]
        %v269 = vld [vmem:[%s1 + $0x10] sm:$0xff]
        %v270 = vld [vmem:[%s1 + $0x18] sm:$0xff]
        %v271 = vld [vmem:[%s2] sm:$0x1]
        %v276 = vlaneseq
        %v277 = vand.u32 %v276, 127
        %v278 = vlaneseq
        %v279 = vshrl.u32 %v278, 7
        %v280 = vsub.s32 %v277, %v279
        %v281 = vrot.slane %v263, %v280
        %v282 = vadd.s32 %v277, 4294967288
        %v283 = vlaneseq
        %v284 = vshrl.u32 %v283, 7
        %v285 = vsub.s32 %v282, %v284
        %v286 = vrot.slane %v264, %v285
        %vm287 = vcmask 130112
        %v288 = vsel %vm287, %v286, %v281
        %v289 = vadd.s32 %v277, 4294967280
        %v290 = vlaneseq
        %v291 = vshrl.u32 %v290, 7
        %v292 = vsub.s32 %v289, %v291
        %v293 = vrot.slane %v265, %v292
        %vm294 = vcmask 195712
        %v295 = vsel %vm294, %v293, %v288
        %v296 = vadd.s32 %v277, 4294967272
        %v297 = vlaneseq
        %v298 = vshrl.u32 %v297, 7
        %v299 = vsub.s32 %v296, %v298
        %v300 = vrot.slane %v266, %v299
        %vm301 = vcmask 261312
        %v302 = vsel %vm301, %v300, %v295
        %vm303 = vcmask 261120
        %v304 = vsel %vm303, %v302, 0
        %306 = vmatprep.subr.mxu0 0.0
        %307 = vmatpush1.msra.mxu0 %v267
        %308 = vmatprep.subr.mxu0 0.0
        %309 = vmatpush1.msra.mxu0 %v268
        %310 = vmatprep.subr.mxu0 0.0
        %311 = vmatpush1.msra.mxu0 %v269
        %312 = vmatprep.subr.mxu0 0.0
        %313 = vmatpush1.msra.mxu0 %v270
        %314 = vmatprep.subr.mxu0 0.0
        %315 = vmatpush1.msra.mxu0 0.0
        %316 = vmatprep.subr.mxu0 0.0
        %317 = vmatpush1.msra.mxu0 0.0
        %318 = vmatprep.subr.mxu0 0.0
        %319 = vmatpush1.msra.mxu0 0.0
        %320 = vmatprep.subr.mxu0 0.0
        %321 = vmatpush1.msra.mxu0 0.0
        %322 = vmatprep.subr.mxu0 0.0
        %323 = vmatpush1.msra.mxu0 0.0
        %324 = vmatprep.subr.mxu0 0.0
        %325 = vmatpush1.msra.mxu0 0.0
        %326 = vmatprep.subr.mxu0 0.0
        %327 = vmatpush1.msra.mxu0 0.0
        %328 = vmatprep.subr.mxu0 0.0
        %329 = vmatpush1.msra.mxu0 0.0
        %330 = vmatprep.subr.mxu0 0.0
        %331 = vmatpush1.msra.mxu0 0.0
        %332 = vmatprep.subr.mxu0 0.0
        %333 = vmatpush1.msra.mxu0 0.0
        %334 = vmatprep.subr.mxu0 0.0
        %335 = vmatpush1.msra.mxu0 0.0
        %336 = vmatprep.subr.mxu0 0.0
        %337 = vmatpush1.msra.mxu0 0.0
        %338 = vmatprep.subr.mxu0 0.0
        %339 = vmatpush1.msra.mxu0 0.0
        %340 = vmatprep.subr.mxu0 0.0
        %341 = vmatpush1.msra.mxu0 0.0
        %342 = vmatprep.subr.mxu0 0.0
        %343 = vmatpush1.msra.mxu0 0.0
        %344 = vmatprep.subr.mxu0 0.0
        %345 = vmatpush1.msra.mxu0 0.0
        %346 = vmatprep.subr.mxu0 0.0
        %347 = vmatpush1.msra.mxu0 0.0
        %348 = vmatprep.subr.mxu0 0.0
        %349 = vmatpush1.msra.mxu0 0.0
        %350 = vmatprep.subr.mxu0 0.0
        %351 = vmatpush1.msra.mxu0 0.0
        %352 = vmatprep.subr.mxu0 0.0
        %353 = vmatpush1.msra.mxu0 0.0
        %354 = vmatprep.subr.mxu0 0.0
        %355 = vmatpush1.msra.mxu0 0.0
        %356 = vmatprep.subr.mxu0 0.0
        %357 = vmatpush1.msra.mxu0 0.0
        %358 = vmatprep.subr.mxu0 0.0
        %359 = vmatpush1.msra.mxu0 0.0
        %360 = vmatprep.subr.mxu0 0.0
        %361 = vmatpush1.msra.mxu0 0.0
        %362 = vmatprep.subr.mxu0 0.0
        %363 = vmatpush1.msra.mxu0 0.0
        %364 = vmatprep.subr.mxu0 0.0
        %365 = vmatpush1.msra.mxu0 0.0
        %366 = vmatprep.subr.mxu0 0.0
        %367 = vmatpush1.msra.mxu0 0.0
        %368 = vmatprep.subr.mxu0 0.0
        %369 = vmatpush1.msra.mxu0 0.0
        %370 = vmatprep.mubr.f32.mxu0 0.0
        %371 = vmatmul.mubr.f32.gmra.mrb[0].mxu0 %v304
        %v372 = vpop.f32.mrb[0].mxu0
        %v373 = vadd.f32 %v271, %v372
        %v374 = vpop.f32.mrb[0].mxu0
        %375 = vdwg.mxu0
        %v376 = vmax.f32 %v373, 0.0
        %v377 = vld [vmem:[%s3] sm:$0xff]
        %v378 = vld [vmem:[%s4] sm:$0x1]
        %vm379 = vcmask 64512
        %v381 = vsel %vm379, %v376, 0
        %383 = vmatprep.subr.mxu0 0.0
        %384 = vmatpush1.msra.mxu0 %v377
        %385 = vmatprep.subr.mxu0 0.0
        %386 = vmatpush1.msra.mxu0 0.0
        %387 = vmatprep.subr.mxu0 0.0
        %388 = vmatpush1.msra.mxu0 0.0
        %389 = vmatprep.subr.mxu0 0.0
        %390 = vmatpush1.msra.mxu0 0.0
        %391 = vmatprep.subr.mxu0 0.0
        %392 = vmatpush1.msra.mxu0 0.0
        %393 = vmatprep.subr.mxu0 0.0
        %394 = vmatpush1.msra.mxu0 0.0
        %395 = vmatprep.subr.mxu0 0.0
        %396 = vmatpush1.msra.mxu0 0.0
        %397 = vmatprep.subr.mxu0 0.0
        %398 = vmatpush1.msra.mxu0 0.0
        %399 = vmatprep.subr.mxu0 0.0
        %400 = vmatpush1.msra.mxu0 0.0
        %401 = vmatprep.subr.mxu0 0.0
        %402 = vmatpush1.msra.mxu0 0.0
        %403 = vmatprep.subr.mxu0 0.0
        %404 = vmatpush1.msra.mxu0 0.0
        %405 = vmatprep.subr.mxu0 0.0
        %406 = vmatpush1.msra.mxu0 0.0
        %407 = vmatprep.subr.mxu0 0.0
        %408 = vmatpush1.msra.mxu0 0.0
        %409 = vmatprep.subr.mxu0 0.0
        %410 = vmatpush1.msra.mxu0 0.0
        %411 = vmatprep.subr.mxu0 0.0
        %412 = vmatpush1.msra.mxu0 0.0
        %413 = vmatprep.subr.mxu0 0.0
        %414 = vmatpush1.msra.mxu0 0.0
        %415 = vmatprep.subr.mxu0 0.0
        %416 = vmatpush1.msra.mxu0 0.0
        %417 = vmatprep.subr.mxu0 0.0
        %418 = vmatpush1.msra.mxu0 0.0
        %419 = vmatprep.subr.mxu0 0.0
        %420 = vmatpush1.msra.mxu0 0.0
        %421 = vmatprep.subr.mxu0 0.0
        %422 = vmatpush1.msra.mxu0 0.0
        %423 = vmatprep.subr.mxu0 0.0
        %424 = vmatpush1.msra.mxu0 0.0
        %425 = vmatprep.subr.mxu0 0.0
        %426 = vmatpush1.msra.mxu0 0.0
        %427 = vmatprep.subr.mxu0 0.0
        %428 = vmatpush1.msra.mxu0 0.0
        %429 = vmatprep.subr.mxu0 0.0
        %430 = vmatpush1.msra.mxu0 0.0
        %431 = vmatprep.subr.mxu0 0.0
        %432 = vmatpush1.msra.mxu0 0.0
        %433 = vmatprep.subr.mxu0 0.0
        %434 = vmatpush1.msra.mxu0 0.0
        %435 = vmatprep.subr.mxu0 0.0
        %436 = vmatpush1.msra.mxu0 0.0
        %437 = vmatprep.subr.mxu0 0.0
        %438 = vmatpush1.msra.mxu0 0.0
        %439 = vmatprep.subr.mxu0 0.0
        %440 = vmatpush1.msra.mxu0 0.0
        %441 = vmatprep.subr.mxu0 0.0
        %442 = vmatpush1.msra.mxu0 0.0
        %443 = vmatprep.subr.mxu0 0.0
        %444 = vmatpush1.msra.mxu0 0.0
        %445 = vmatprep.subr.mxu0 0.0
        %446 = vmatpush1.msra.mxu0 0.0
        %447 = vmatprep.mubr.f32.mxu0 0.0
        %448 = vmatmul.mubr.f32.gmra.mrb[0].mxu0 %v381
        %v449 = vpop.f32.mrb[0].mxu0
        %v450 = vadd.f32 %v378, %v449
        %v451 = vpop.f32.mrb[0].mxu0
        %452 = vdwg.mxu0
        %v453 = vxor.u32 %v450, 2147483648
        %v454 = vmul.f32 %v453, 1.442695
        %v455 = vpow.pop %v454
        %v456 = vadd.f32 %v455, 1.0
        %v457 = vrcp.pop %v456
        %v458 = vmul.f32 1.0, %v457
        %v459 = vlaneseq
        %v460 = vshrl.u32 %v459, 7
        %v461 = vsub.s32 0, %v460
        %v462 = vrot.slane %v458, %v461
        %464 = vbcast.lane.b32.xlu0 %v462, 256
        %v465 = vpop.permute.xlu0 %464
        %s467 = sor.u32 256, 8
        %468 = vbcast.lane.b32.xlu0 %v462, %s467
        %v469 = vpop.permute.xlu0 %468
        %s471 = sor.u32 256, 16
        %472 = vbcast.lane.b32.xlu0 %v462, %s471
        %v473 = vpop.permute.xlu0 %472
        %s475 = sor.u32 256, 24
        %476 = vbcast.lane.b32.xlu0 %v462, %s475
        %v477 = vpop.permute.xlu0 %476
        %v478 = vmul.f32 %v243, %v465
        %v479 = vmul.f32 %v244, %v465
        %v480 = vmul.f32 %v245, %v469
        %v481 = vmul.f32 %v246, %v469
        %v482 = vmul.f32 %v247, %v473
        %v483 = vmul.f32 %v248, %v473
        %v484 = vmul.f32 %v249, %v477
        %v485 = vmul.f32 %v250, %v477
        %486 = vst [vmem:[%s242] sm:$0xff] %v478
        %487 = vst [vmem:[%s242 + $0x8] sm:$0xff] %v479
        %488 = vst [vmem:[%s242 + $0x10] sm:$0xff] %v480
        %489 = vst [vmem:[%s242 + $0x18] sm:$0xff] %v481
        %490 = vst [vmem:[%s242 + $0x20] sm:$0xff] %v482
        %491 = vst [vmem:[%s242 + $0x28] sm:$0xff] %v483
        %492 = vst [vmem:[%s242 + $0x30] sm:$0xff] %v484
        %493 = vst [vmem:[%s242 + $0x38] sm:$0xff] %v485
        %s494 = sand.u32 %s140, 1
        %s495 = scalar_lea.sflag [#allocation4], %s494
        %s496 = sand.u32 %s140, 1
        %s497 = smul.addr %s496, 64
        %s498 = scalar_lea.vmem [#allocation5], %s497
        // Predicated region
        $region45: #{tpu_custom_call.1} parent=39 // pred_check
          %p499 = pneg %p150
        $region46: #{tpu_custom_call.1} parent=39 // pred_check_branch
          %501 = sbr.rel (%p499) target = $region48
        $region47: #{tpu_custom_call.1} parent=39 // pred_region
          %s503 = ssub.s32 1024, 1024
          %504 = vsyncadd %s495, %s503
          %s505 = smul.addr %s22, 8
          %s506 = smul.addr %s505, 128
          %s507 = scalar_lea.hbm %s5, %s506
          %s508 = sshll.u32 %s498, 4
          %s509 = int_to_ptr.vmem [resolvable:$true] %s508
          %514 = dma.vmem_to_hbm [thread:$0]  %s509, 1024, %s507, %s495, 256, 256, 16
        $region48: #{tpu_custom_call.1} parent=39 // pred_fallthru
          _
      $region40: #{tpu_custom_call.1} parent=5 // pred_fallthru
        _
      %p515 = scmp.le.s32.totalorder 2, %s17
      // Predicated region
      $region49: #{tpu_custom_call.1} parent=5 // pred_check
        %p516 = pneg %p515
      $region50: #{tpu_custom_call.1} parent=5 // pred_check_branch
        %518 = sbr.rel (%p516) target = $region52
      $region51: #{tpu_custom_call.1} parent=5 // pred_region
        %s519 = ssub.s32 %s17, 2
        // Predicated region
        $region53: #{tpu_custom_call.1} parent=51 // pred_check
          %p520 = pneg %p156
        $region54: #{tpu_custom_call.1} parent=51 // pred_check_branch
          %522 = sbr.rel (%p520) target = $region56
        $region55: #{tpu_custom_call.1} parent=51 // pred_region
          %s523 = sand.u32 %s141, 1
          %s524 = scalar_lea.sflag [#allocation4], %s523
          %s525 = sand.u32 %s141, 1
          %s526 = smul.addr %s525, 64
          %s527 = scalar_lea.vmem [#allocation5], %s526
          %528 = dma.done %s524, 1024
        $region56: #{tpu_custom_call.1} parent=51 // pred_fallthru
          _
      $region52: #{tpu_custom_call.1} parent=5 // pred_fallthru
        _
    $region6: #{tpu_custom_call.1} parent=1 // loop_footer
      %s21 = sadd.s32 1, %s17
    $region7: #{tpu_custom_call.1} parent=1 // loop_footer_branch
      %16 = sbr.rel target = $region3
    $region8: #{tpu_custom_call.1} parent=1 // loop_exit
      _
    %529 = vsyncpa [#allocation3], 1
    %s530 = scalar_lea.sflag [#allocation3], 1
    %531 = vsyncpa %s530, 1
    %532 = vsyncpa [#allocation4], 1
    %s533 = scalar_lea.sflag [#allocation4], 1
    %534 = vsyncpa %s533, 1

</llo_original>
